<compile_context>
chip_gen: v7x
topology: tpu7x:2x2x1
jax: 0.10.0
libtpu: 0.0.40
codegen_flags: <defaults>
</compile_context>

<pallas_src>
import jax
import jax.numpy as jnp
from jax.experimental import pallas as pl
from jax.experimental.pallas import tpu as pltpu


def _round_up(x, m):
    return ((x + m - 1) // m) * m


# ---------------------------------------------------------------------------
# Kernel
# ---------------------------------------------------------------------------
def mlp_kernel(x_ref, w1_ref, b1_ref, w2_ref, b2_ref, w3_ref, b3_ref, o_ref):
    # x arrives as f32 (no wrapper-side cast pass); cast to bf16 on the VPU,
    # which has enormous slack in this HBM-bound kernel.
    x = x_ref[...].astype(jnp.bfloat16)                                # (tb, D_in)

    h1 = jnp.dot(x, w1_ref[...], preferred_element_type=jnp.float32) + b1_ref[...]
    h1 = jnp.maximum(h1, 0.0)                                          # ReLU 1 (f32)

    h2 = jnp.dot(h1.astype(jnp.bfloat16), w2_ref[...],
                 preferred_element_type=jnp.float32) + b2_ref[...]
    h2 = jnp.maximum(h2, 0.0)                                          # ReLU 2 (f32)

    h3 = jnp.dot(h2.astype(jnp.bfloat16), w3_ref[...],
                 preferred_element_type=jnp.float32) + b3_ref[...]

    # Unpadded store: block last dim == full array dim (D_out). Masked vst per
    # step, but ~12.8x fewer output HBM bytes than a 128-lane padded f32 store.
    o_ref[...] = h3.astype(o_ref.dtype)


# ---------------------------------------------------------------------------
# References / fallback
# ---------------------------------------------------------------------------
def mlp_reference_f32(x, params):
    """Full-f32 PyTorch-equivalent math (sanity check only)."""
    h = jnp.maximum(x @ params["w1"] + params["b1"], 0.0)
    h = jnp.maximum(h @ params["w2"] + params["b2"], 0.0)
    return h @ params["w3"] + params["b3"]


def mlp_reference_matched(x, params):
    """Same numerics as the kernel (bf16 MXU operands, f32 accumulate).

    Also used as the tiny-batch fallback so results do not depend on batch size.
    """
    w1 = params["w1"].astype(jnp.bfloat16)
    w2 = params["w2"].astype(jnp.bfloat16)
    w3 = params["w3"].astype(jnp.bfloat16)
    xb = x.astype(jnp.bfloat16)
    h1 = jnp.maximum(
        jnp.dot(xb, w1, preferred_element_type=jnp.float32) + params["b1"], 0.0)
    h2 = jnp.maximum(
        jnp.dot(h1.astype(jnp.bfloat16), w2,
                preferred_element_type=jnp.float32) + params["b2"], 0.0)
    return jnp.dot(h2.astype(jnp.bfloat16), w3,
                   preferred_element_type=jnp.float32) + params["b3"]


# ---------------------------------------------------------------------------
# Wrapper
# ---------------------------------------------------------------------------
def _choose_batch_tile(B):
    """Pick a batch tile: big (amortize ~0.35us/step) but keep >=4 grid steps so
    v7x's two TensorCores each pipeline >=2 steps. Multiple of 8 (f32 sublanes)."""
    tb = min(2048, _round_up(B, 8))
    if B >= 4 * 8:
        target = _round_up(pl.cdiv(B, 4), 8)   # ~4 grid steps when B is modest
        tb = min(tb, target)
    return max(tb, 8)


def mlp_forward(x, params, *, batch_tile=None, force_pallas=False,
                min_pallas_batch=1024):
    """Run the fused MLP. x: (B, D_in) float32. params: dict of weights/biases."""
    B, D_in = x.shape
    D_out = params["w3"].shape[1]

    # Tiny batches: launch + per-step overhead dominates -> plain XLA, but with
    # the SAME bf16-operand math as the kernel (batch-size-independent results).
    if (not force_pallas and B < min_pallas_batch) or B < 8:
        return mlp_reference_matched(x, params)

    tb = _choose_batch_tile(B) if batch_tile is None else batch_tile
    assert tb % 8 == 0, "batch tile must be a multiple of 8 (f32 sublanes)"

    # No batch-remainder pad: cdiv grid. OOB rows of the last partial block are
    # read-undefined / write-dropped by Pallas; rows are independent so this is safe.
    grid = (pl.cdiv(B, tb),)

    # Weights/biases are tiny (<16 KB total) and reused every step: cast once in the
    # wrapper (negligible HBM) and give every grid step the full tensor. Constant
    # block indices mean Pallas keeps them resident instead of re-fetching.
    w1 = params["w1"].astype(jnp.bfloat16)
    w2 = params["w2"].astype(jnp.bfloat16)
    w3 = params["w3"].astype(jnp.bfloat16)
    b1 = params["b1"].astype(jnp.float32)
    b2 = params["b2"].astype(jnp.float32)
    b3 = params["b3"].astype(jnp.float32)

    full = lambda a: pl.BlockSpec(a.shape, lambda i: (0,) * a.ndim)

    out = pl.pallas_call(
        mlp_kernel,
        out_shape=jax.ShapeDtypeStruct((B, D_out), jnp.float32),
        grid_spec=pltpu.PrefetchScalarGridSpec(
            num_scalar_prefetch=0,
            grid=grid,
            in_specs=[
                pl.BlockSpec((tb, D_in), lambda i: (i, 0)),   # x: tiled over batch (f32)
                full(w1), full(b1),
                full(w2), full(b2),
                full(w3), full(b3),
            ],
            out_specs=pl.BlockSpec((tb, D_out), lambda i: (i, 0)),
        ),
        compiler_params=pltpu.CompilerParams(
            dimension_semantics=("parallel",),   # batch axis -> megacore shardable
        ),
    )(x, w1, b1, w2, b2, w3, b3)

    return out


# ---------------------------------------------------------------------------
# Parameter init (mirrors nn.Linear's U(-1/sqrt(fan_in), 1/sqrt(fan_in)))
# ---------------------------------------------------------------------------
def init_params(key, input_size, output_size):
    """Weights stored transposed: (fan_in, fan_out); biases as (1, fan_out)."""
    dims = [(input_size, 32), (32, 16), (16, output_size)]
    params = {}
    for idx, (fan_in, fan_out) in enumerate(dims, start=1):
        key, kw, kb = jax.random.split(key, 3)
        bound = 1.0 / jnp.sqrt(jnp.float32(fan_in))
        params[f"w{idx}"] = jax.random.uniform(
            kw, (fan_in, fan_out), jnp.float32, -bound, bound)
        params[f"b{idx}"] = jax.random.uniform(
            kb, (1, fan_out), jnp.float32, -bound, bound)
    return params


if __name__ == "__main__":
    key = jax.random.PRNGKey(0)
    key, kx = jax.random.split(key)

    # Small but kernel-meaningful shapes: default tile heuristic gives tb=64,
    # grid=(4,), so the pipeline overlaps DMA with compute and both v7x cores work.
    B, input_size, output_size = 256, 64, 10
    x = jax.random.normal(kx, (B, input_size), jnp.float32)
    params = init_params(key, input_size, output_size)

    out = mlp_forward(x, params, force_pallas=True)
    out = jax.block_until_ready(out)
    assert out.shape == (B, output_size)

    # Compare against a dtype-matched pure-JAX reference (bf16 operands -> ~1e-3 tol).
    ref = mlp_reference_matched(x, params)
    assert jnp.allclose(out, ref, atol=2e-3, rtol=2e-3), "mismatch vs matched reference"

    # Sanity: bf16 path stays close to the full-f32 PyTorch-equivalent math.
    ref_f32 = mlp_reference_f32(x, params)
    assert jnp.allclose(out, ref_f32, atol=5e-2, rtol=5e-2), "mismatch vs f32 reference"

    # Explicit batch tile (non-default) and a B not divisible by the tile (partial
    # last block, no pad path) must also match.
    out2 = mlp_forward(x[:200], params, batch_tile=64, force_pallas=True)
    assert jnp.allclose(out2, ref[:200], atol=2e-3, rtol=2e-3), "partial-block mismatch"

    # Tiny-batch gate: plain-XLA fallback with the same bf16 numerics as the kernel.
    small = mlp_forward(x[:8], params)
    assert jnp.allclose(small, ref[:8], atol=1e-5, rtol=1e-5), "fallback mismatch"

    print("KERNEL_OK")
</pallas_src>

<mosaic_0001>
module attributes {stable_mosaic.version = 11 : i64} {
  func.func @mlp_kernel(%arg0: i32, %arg1: memref<64x64xf32, #tpu.memory_space<vmem>>, %arg2: memref<64x32xbf16, #tpu.memory_space<vmem>>, %arg3: memref<1x32xf32, #tpu.memory_space<vmem>>, %arg4: memref<32x16xbf16, #tpu.memory_space<vmem>>, %arg5: memref<1x16xf32, #tpu.memory_space<vmem>>, %arg6: memref<16x10xbf16, #tpu.memory_space<vmem>>, %arg7: memref<1x10xf32, #tpu.memory_space<vmem>>, %arg8: memref<64x10xf32, #tpu.memory_space<vmem>>) attributes {dimension_semantics = [#tpu.dimension_semantics<parallel>], iteration_bounds = array<i64: 4>, scalar_prefetch = 0 : i64, scratch_operands = 0 : i64, tpu.core_type = #tpu.core_type<tc>, window_params = [{transform_indices = @transform_0, window_bounds = array<i64: 64, 64>}, {pipeline_mode = #tpu.pipeline_mode<synchronous>, transform_indices = @transform_1, window_bounds = array<i64: 64, 32>}, {pipeline_mode = #tpu.pipeline_mode<synchronous>, transform_indices = @transform_2, window_bounds = array<i64: 1, 32>}, {pipeline_mode = #tpu.pipeline_mode<synchronous>, transform_indices = @transform_3, window_bounds = array<i64: 32, 16>}, {pipeline_mode = #tpu.pipeline_mode<synchronous>, transform_indices = @transform_4, window_bounds = array<i64: 1, 16>}, {pipeline_mode = #tpu.pipeline_mode<synchronous>, transform_indices = @transform_5, window_bounds = array<i64: 16, 10>}, {pipeline_mode = #tpu.pipeline_mode<synchronous>, transform_indices = @transform_6, window_bounds = array<i64: 1, 10>}, {transform_indices = @transform_7, window_bounds = array<i64: 64, 10>}]} {
    %c0 = arith.constant 0 : index
    %c0_0 = arith.constant 0 : index
    %0 = vector.load %arg1[%c0, %c0_0] : memref<64x64xf32, #tpu.memory_space<vmem>>, vector<64x64xf32>
    %1 = arith.truncf %0 : vector<64x64xf32> to vector<64x64xbf16>
    %c0_1 = arith.constant 0 : index
    %c0_2 = arith.constant 0 : index
    %2 = vector.load %arg2[%c0_1, %c0_2] : memref<64x32xbf16, #tpu.memory_space<vmem>>, vector<64x32xbf16>
    %cst = arith.constant dense<0.000000e+00> : vector<64x32xf32>
    %3 = tpu.matmul %1, %2, %cst {dimension_numbers = #tpu.dot_dimension_numbers<[1], [0], [0], [1], [0, 0, 1, 1], [], []>} : vector<64x64xbf16>, vector<64x32xbf16>, vector<64x32xf32> -> vector<64x32xf32>
    %c0_3 = arith.constant 0 : index
    %c0_4 = arith.constant 0 : index
    %4 = vector.load %arg3[%c0_3, %c0_4] : memref<1x32xf32, #tpu.memory_space<vmem>>, vector<1x32xf32>
    %5 = vector.broadcast %4 : vector<1x32xf32> to vector<64x32xf32>
    %6 = arith.addf %3, %5 : vector<64x32xf32>
    %cst_5 = arith.constant 0.000000e+00 : f32
    %7 = vector.broadcast %cst_5 : f32 to vector<64x32xf32>
    %8 = arith.maximumf %6, %7 : vector<64x32xf32>
    %9 = arith.truncf %8 : vector<64x32xf32> to vector<64x32xbf16>
    %c0_6 = arith.constant 0 : index
    %c0_7 = arith.constant 0 : index
    %10 = vector.load %arg4[%c0_6, %c0_7] : memref<32x16xbf16, #tpu.memory_space<vmem>>, vector<32x16xbf16>
    %cst_8 = arith.constant dense<0.000000e+00> : vector<64x16xf32>
    %11 = tpu.matmul %9, %10, %cst_8 {dimension_numbers = #tpu.dot_dimension_numbers<[1], [0], [0], [1], [0, 0, 1, 1], [], []>} : vector<64x32xbf16>, vector<32x16xbf16>, vector<64x16xf32> -> vector<64x16xf32>
    %c0_9 = arith.constant 0 : index
    %c0_10 = arith.constant 0 : index
    %12 = vector.load %arg5[%c0_9, %c0_10] : memref<1x16xf32, #tpu.memory_space<vmem>>, vector<1x16xf32>
    %13 = vector.broadcast %12 : vector<1x16xf32> to vector<64x16xf32>
    %14 = arith.addf %11, %13 : vector<64x16xf32>
    %cst_11 = arith.constant 0.000000e+00 : f32
    %15 = vector.broadcast %cst_11 : f32 to vector<64x16xf32>
    %16 = arith.maximumf %14, %15 : vector<64x16xf32>
    %17 = arith.truncf %16 : vector<64x16xf32> to vector<64x16xbf16>
    %c0_12 = arith.constant 0 : index
    %c0_13 = arith.constant 0 : index
    %18 = vector.load %arg6[%c0_12, %c0_13] : memref<16x10xbf16, #tpu.memory_space<vmem>>, vector<16x10xbf16>
    %cst_14 = arith.constant dense<0.000000e+00> : vector<64x10xf32>
    %19 = tpu.matmul %17, %18, %cst_14 {dimension_numbers = #tpu.dot_dimension_numbers<[1], [0], [0], [1], [0, 0, 1, 1], [], []>} : vector<64x16xbf16>, vector<16x10xbf16>, vector<64x10xf32> -> vector<64x10xf32>
    %c0_15 = arith.constant 0 : index
    %c0_16 = arith.constant 0 : index
    %20 = vector.load %arg7[%c0_15, %c0_16] : memref<1x10xf32, #tpu.memory_space<vmem>>, vector<1x10xf32>
    %21 = vector.broadcast %20 : vector<1x10xf32> to vector<64x10xf32>
    %22 = arith.addf %19, %21 : vector<64x10xf32>
    %c0_17 = arith.constant 0 : index
    %c0_18 = arith.constant 0 : index
    %23 = vector.load %arg8[%c0_17, %c0_18] : memref<64x10xf32, #tpu.memory_space<vmem>>, vector<64x10xf32>
    tpu.vector_store %arg8[%c0_17, %c0_18], %22 {strides = array<i32>} : memref<64x10xf32, #tpu.memory_space<vmem>>, vector<64x10xf32>,
    return
  }
  func.func @transform_0(%arg0: i32) -> (i32, i32) {
    %c0_i32 = arith.constant 0 : i32
    %c0_i32_0 = arith.constant 0 : i32
    return %arg0, %c0_i32 : i32, i32
  }
  func.func @transform_1(%arg0: i32) -> (i32, i32) {
    %c0_i32 = arith.constant 0 : i32
    %c0_i32_0 = arith.constant 0 : i32
    %c0_i32_1 = arith.constant 0 : i32
    return %c0_i32, %c0_i32_0 : i32, i32
  }
  func.func @transform_2(%arg0: i32) -> (i32, i32) {
    %c0_i32 = arith.constant 0 : i32
    %c0_i32_0 = arith.constant 0 : i32
    %c0_i32_1 = arith.constant 0 : i32
    return %c0_i32, %c0_i32_0 : i32, i32
  }
  func.func @transform_3(%arg0: i32) -> (i32, i32) {
    %c0_i32 = arith.constant 0 : i32
    %c0_i32_0 = arith.constant 0 : i32
    %c0_i32_1 = arith.constant 0 : i32
    return %c0_i32, %c0_i32_0 : i32, i32
  }
  func.func @transform_4(%arg0: i32) -> (i32, i32) {
    %c0_i32 = arith.constant 0 : i32
    %c0_i32_0 = arith.constant 0 : i32
    %c0_i32_1 = arith.constant 0 : i32
    return %c0_i32, %c0_i32_0 : i32, i32
  }
  func.func @transform_5(%arg0: i32) -> (i32, i32) {
    %c0_i32 = arith.constant 0 : i32
    %c0_i32_0 = arith.constant 0 : i32
    %c0_i32_1 = arith.constant 0 : i32
    return %c0_i32, %c0_i32_0 : i32, i32
  }
  func.func @transform_6(%arg0: i32) -> (i32, i32) {
    %c0_i32 = arith.constant 0 : i32
    %c0_i32_0 = arith.constant 0 : i32
    %c0_i32_1 = arith.constant 0 : i32
    return %c0_i32, %c0_i32_0 : i32, i32
  }
  func.func @transform_7(%arg0: i32) -> (i32, i32) {
    %c0_i32 = arith.constant 0 : i32
    %c0_i32_0 = arith.constant 0 : i32
    return %arg0, %c0_i32 : i32, i32
  }
}

</mosaic_0001>

<llo_original>
// kernel: tpu_custom_call.1
$region0: #{tpu_custom_call.1}
  #allocation0 [shape = 'u32[]', space=smem, size = 0x4, offset = 0x4, fixed_abs, tag = 'smem constant byte address 0x4 - core index']
  #allocation1 [shape = 'u32[144,128]{1,0:T(1,128)}', space=vmem, size = 0x12000, scoped, tag = 'internal scratch']
  %s0 = inlined_call_operand.vmem [shape: f32[256,64], index: 0, kind: input, shape index: {}]
  %s1 = inlined_call_operand.vmem [shape: bf16[64,32], index: 1, kind: input, shape index: {}]
  %s2 = inlined_call_operand.vmem [shape: f32[1,32], index: 2, kind: input, shape index: {}]
  %s3 = inlined_call_operand.vmem [shape: bf16[32,16], index: 3, kind: input, shape index: {}]
  %s4 = inlined_call_operand.vmem [shape: f32[1,16], index: 4, kind: input, shape index: {}]
  %s5 = inlined_call_operand.vmem [shape: bf16[16,10], index: 5, kind: input, shape index: {}]
  %s6 = inlined_call_operand.vmem [shape: f32[1,10], index: 6, kind: input, shape index: {}]
  %s7 = inlined_call_operand.vmem [shape: f32[256,10], index: 7, kind: output, shape index: {}]
  %s8 = sld [smem:[#allocation0]]
  $region61: #{tpu_custom_call.1} parent=0
    _
  %s10 = ssub.s32 1, %s8
  %s11 = scalar_select 0, %s10, %s8
  loop: start=0, step=1, limit=6
  $region2: #{tpu_custom_call.1} parent=0 // loop_pre_header
    _
  $region3: #{tpu_custom_call.1} parent=0 // loop_header
    %s13 = sphi 0, %s17
    %p14 = scmp.ge.s32.totalorder %s13, 6
    %s23 = sphi 0, %s25
    %s26 = sphi 0, %s23
    %s27 = sphi 0, %s26
    %s43 = sphi 0, %s27
    %s47 = sphi 0, %s47
    %s49 = sphi 0, %s47
    %s50 = sphi 0, %s49
    %s64 = sphi 0, %s50
    %s68 = sphi 0, %s68
    %s70 = sphi 0, %s68
    %s71 = sphi 0, %s70
    %s85 = sphi 0, %s71
    %s89 = sphi 0, %s89
    %s91 = sphi 0, %s89
    %s92 = sphi 0, %s91
    %s106 = sphi 0, %s92
    %s110 = sphi 0, %s110
    %s112 = sphi 0, %s110
    %s113 = sphi 0, %s112
    %s127 = sphi 0, %s113
    %s131 = sphi 0, %s131
    %s133 = sphi 0, %s131
    %s134 = sphi 0, %s133
    %s148 = sphi 0, %s134
    %s152 = sphi 0, %s152
    %s154 = sphi 0, %s152
    %s155 = sphi 0, %s154
    %s169 = sphi 0, %s155
    %s175 = sphi 0, %s177
    %s178 = sphi 0, %s175
    %s179 = sphi 0, %s178
    %s195 = sphi 0, %s179
  $region4: #{tpu_custom_call.1} parent=0 // loop_header_branch
    %16 = sbr.rel (%p14) target = $region8
  $region5: #{tpu_custom_call.1} parent=0 // loop_body
    %s18 = ssub.s32 %s13, 1
    %s19 = ssub.s32 %s13, 2
    %s20 = sadd.s32 %s13, 1
    %s21 = ssub.s32 %s13, %s20
    %p22 = scmp.eq.s32.totalorder %s21, 0
    %s24 = sadd.s32 %s23, 1
    %s25 = scalar_select %p22, %s23, %s24
    %p28 = pneg %p22
    %p29 = scmp.eq.s32.totalorder %s13, 3
    %p30 = por %p28, %p29
    %p31 = scmp.ne.s32.totalorder %s23, %s26
    %p32 = scmp.eq.s32.totalorder %s13, 0
    %p33 = por %p31, %p32
    %p34 = scmp.ne.s32.totalorder %s23, %s26
    %p35 = scmp.eq.s32.totalorder %s18, 3
    %p36 = por %p34, %p35
    %p37 = scmp.ne.s32.totalorder %s26, %s27
    %p38 = scmp.eq.s32.totalorder %s18, 0
    %p39 = por %p37, %p38
    %p40 = scmp.ne.s32.totalorder %s26, %s27
    %p41 = scmp.eq.s32.totalorder %s19, 3
    %p42 = por %p40, %p41
    %p44 = scmp.ne.s32.totalorder %s27, %s43
    %p45 = scmp.eq.s32.totalorder %s19, 0
    %p46 = por %p44, %p45
    %s48 = sadd.s32 %s47, 1
    %p51 = scmp.eq.s32.totalorder %s13, 3
    %p52 = scmp.ne.s32.totalorder %s47, %s49
    %p53 = scmp.eq.s32.totalorder %s13, 0
    %p54 = por %p52, %p53
    %p55 = scmp.ne.s32.totalorder %s47, %s49
    %p56 = scmp.eq.s32.totalorder %s18, 3
    %p57 = por %p55, %p56
    %p58 = scmp.ne.s32.totalorder %s49, %s50
    %p59 = scmp.eq.s32.totalorder %s18, 0
    %p60 = por %p58, %p59
    %p61 = scmp.ne.s32.totalorder %s49, %s50
    %p62 = scmp.eq.s32.totalorder %s19, 3
    %p63 = por %p61, %p62
    %p65 = scmp.ne.s32.totalorder %s50, %s64
    %p66 = scmp.eq.s32.totalorder %s19, 0
    %p67 = por %p65, %p66
    %s69 = sadd.s32 %s68, 1
    %p72 = scmp.eq.s32.totalorder %s13, 3
    %p73 = scmp.ne.s32.totalorder %s68, %s70
    %p74 = scmp.eq.s32.totalorder %s13, 0
    %p75 = por %p73, %p74
    %p76 = scmp.ne.s32.totalorder %s68, %s70
    %p77 = scmp.eq.s32.totalorder %s18, 3
    %p78 = por %p76, %p77
    %p79 = scmp.ne.s32.totalorder %s70, %s71
    %p80 = scmp.eq.s32.totalorder %s18, 0
    %p81 = por %p79, %p80
    %p82 = scmp.ne.s32.totalorder %s70, %s71
    %p83 = scmp.eq.s32.totalorder %s19, 3
    %p84 = por %p82, %p83
    %p86 = scmp.ne.s32.totalorder %s71, %s85
    %p87 = scmp.eq.s32.totalorder %s19, 0
    %p88 = por %p86, %p87
    %s90 = sadd.s32 %s89, 1
    %p93 = scmp.eq.s32.totalorder %s13, 3
    %p94 = scmp.ne.s32.totalorder %s89, %s91
    %p95 = scmp.eq.s32.totalorder %s13, 0
    %p96 = por %p94, %p95
    %p97 = scmp.ne.s32.totalorder %s89, %s91
    %p98 = scmp.eq.s32.totalorder %s18, 3
    %p99 = por %p97, %p98
    %p100 = scmp.ne.s32.totalorder %s91, %s92
    %p101 = scmp.eq.s32.totalorder %s18, 0
    %p102 = por %p100, %p101
    %p103 = scmp.ne.s32.totalorder %s91, %s92
    %p104 = scmp.eq.s32.totalorder %s19, 3
    %p105 = por %p103, %p104
    %p107 = scmp.ne.s32.totalorder %s92, %s106
    %p108 = scmp.eq.s32.totalorder %s19, 0
    %p109 = por %p107, %p108
    %s111 = sadd.s32 %s110, 1
    %p114 = scmp.eq.s32.totalorder %s13, 3
    %p115 = scmp.ne.s32.totalorder %s110, %s112
    %p116 = scmp.eq.s32.totalorder %s13, 0
    %p117 = por %p115, %p116
    %p118 = scmp.ne.s32.totalorder %s110, %s112
    %p119 = scmp.eq.s32.totalorder %s18, 3
    %p120 = por %p118, %p119
    %p121 = scmp.ne.s32.totalorder %s112, %s113
    %p122 = scmp.eq.s32.totalorder %s18, 0
    %p123 = por %p121, %p122
    %p124 = scmp.ne.s32.totalorder %s112, %s113
    %p125 = scmp.eq.s32.totalorder %s19, 3
    %p126 = por %p124, %p125
    %p128 = scmp.ne.s32.totalorder %s113, %s127
    %p129 = scmp.eq.s32.totalorder %s19, 0
    %p130 = por %p128, %p129
    %s132 = sadd.s32 %s131, 1
    %p135 = scmp.eq.s32.totalorder %s13, 3
    %p136 = scmp.ne.s32.totalorder %s131, %s133
    %p137 = scmp.eq.s32.totalorder %s13, 0
    %p138 = por %p136, %p137
    %p139 = scmp.ne.s32.totalorder %s131, %s133
    %p140 = scmp.eq.s32.totalorder %s18, 3
    %p141 = por %p139, %p140
    %p142 = scmp.ne.s32.totalorder %s133, %s134
    %p143 = scmp.eq.s32.totalorder %s18, 0
    %p144 = por %p142, %p143
    %p145 = scmp.ne.s32.totalorder %s133, %s134
    %p146 = scmp.eq.s32.totalorder %s19, 3
    %p147 = por %p145, %p146
    %p149 = scmp.ne.s32.totalorder %s134, %s148
    %p150 = scmp.eq.s32.totalorder %s19, 0
    %p151 = por %p149, %p150
    %s153 = sadd.s32 %s152, 1
    %p156 = scmp.eq.s32.totalorder %s13, 3
    %p157 = scmp.ne.s32.totalorder %s152, %s154
    %p158 = scmp.eq.s32.totalorder %s13, 0
    %p159 = por %p157, %p158
    %p160 = scmp.ne.s32.totalorder %s152, %s154
    %p161 = scmp.eq.s32.totalorder %s18, 3
    %p162 = por %p160, %p161
    %p163 = scmp.ne.s32.totalorder %s154, %s155
    %p164 = scmp.eq.s32.totalorder %s18, 0
    %p165 = por %p163, %p164
    %p166 = scmp.ne.s32.totalorder %s154, %s155
    %p167 = scmp.eq.s32.totalorder %s19, 3
    %p168 = por %p166, %p167
    %p170 = scmp.ne.s32.totalorder %s155, %s169
    %p171 = scmp.eq.s32.totalorder %s19, 0
    %p172 = por %p170, %p171
    %s173 = ssub.s32 %s13, %s20
    %p174 = scmp.eq.s32.totalorder %s173, 0
    %s176 = sadd.s32 %s175, 1
    %s177 = scalar_select %p174, %s175, %s176
    %p180 = pneg %p174
    %p181 = scmp.eq.s32.totalorder %s13, 3
    %p182 = por %p180, %p181
    %p183 = scmp.ne.s32.totalorder %s175, %s178
    %p184 = scmp.eq.s32.totalorder %s13, 0
    %p185 = por %p183, %p184
    %p186 = scmp.ne.s32.totalorder %s175, %s178
    %p187 = scmp.eq.s32.totalorder %s18, 3
    %p188 = por %p186, %p187
    %p189 = scmp.ne.s32.totalorder %s178, %s179
    %p190 = scmp.eq.s32.totalorder %s18, 0
    %p191 = por %p189, %p190
    %p192 = scmp.ne.s32.totalorder %s178, %s179
    %p193 = scmp.eq.s32.totalorder %s19, 3
    %p194 = por %p192, %p193
    %p196 = scmp.ne.s32.totalorder %s179, %s195
    %p197 = scmp.eq.s32.totalorder %s19, 0
    %p198 = por %p196, %p197
    %p199 = scmp.le.s32.totalorder 1, %s13
    %p200 = scmp.lt.s32.totalorder %s13, 5
    %p201 = pnand %p199, %p200
    %p202 = pneg %p201
    // Predicated region
    $region9: #{tpu_custom_call.1} parent=5 // pred_check
      _
    $region10: #{tpu_custom_call.1} parent=5 // pred_check_branch
      %204 = sbr.rel (%p201) target = $region12
    $region11: #{tpu_custom_call.1} parent=5 // pred_region
      %s205 = ssub.s32 %s13, 1
      // Predicated region
      $region13: #{tpu_custom_call.1} parent=11 // pred_check
        %p206 = pneg %p60
      $region14: #{tpu_custom_call.1} parent=11 // pred_check_branch
        %208 = sbr.rel (%p206) target = $region16
      $region15: #{tpu_custom_call.1} parent=11 // pred_region
        _
      $region16: #{tpu_custom_call.1} parent=11 // pred_fallthru
        _
      // Predicated region
      $region17: #{tpu_custom_call.1} parent=11 // pred_check
        %p209 = pneg %p81
      $region18: #{tpu_custom_call.1} parent=11 // pred_check_branch
        %211 = sbr.rel (%p209) target = $region20
      $region19: #{tpu_custom_call.1} parent=11 // pred_region
        _
      $region20: #{tpu_custom_call.1} parent=11 // pred_fallthru
        _
      // Predicated region
      $region21: #{tpu_custom_call.1} parent=11 // pred_check
        %p212 = pneg %p102
      $region22: #{tpu_custom_call.1} parent=11 // pred_check_branch
        %214 = sbr.rel (%p212) target = $region24
      $region23: #{tpu_custom_call.1} parent=11 // pred_region
        _
      $region24: #{tpu_custom_call.1} parent=11 // pred_fallthru
        _
      // Predicated region
      $region25: #{tpu_custom_call.1} parent=11 // pred_check
        %p215 = pneg %p123
      $region26: #{tpu_custom_call.1} parent=11 // pred_check_branch
        %217 = sbr.rel (%p215) target = $region28
      $region27: #{tpu_custom_call.1} parent=11 // pred_region
        _
      $region28: #{tpu_custom_call.1} parent=11 // pred_fallthru
        _
      // Predicated region
      $region29: #{tpu_custom_call.1} parent=11 // pred_check
        %p218 = pneg %p144
      $region30: #{tpu_custom_call.1} parent=11 // pred_check_branch
        %220 = sbr.rel (%p218) target = $region32
      $region31: #{tpu_custom_call.1} parent=11 // pred_region
        _
      $region32: #{tpu_custom_call.1} parent=11 // pred_fallthru
        _
      // Predicated region
      $region33: #{tpu_custom_call.1} parent=11 // pred_check
        %p221 = pneg %p165
      $region34: #{tpu_custom_call.1} parent=11 // pred_check_branch
        %223 = sbr.rel (%p221) target = $region36
      $region35: #{tpu_custom_call.1} parent=11 // pred_region
        _
      $region36: #{tpu_custom_call.1} parent=11 // pred_fallthru
        _
    $region12: #{tpu_custom_call.1} parent=5 // pred_fallthru
      _
    %p224 = scmp.lt.s32.totalorder %s13, 4
    // Predicated region
    $region37: #{tpu_custom_call.1} parent=5 // pred_check
      %p225 = pneg %p224
    $region38: #{tpu_custom_call.1} parent=5 // pred_check_branch
      %227 = sbr.rel (%p225) target = $region40
    $region39: #{tpu_custom_call.1} parent=5 // pred_region
      // Predicated region
      $region41: #{tpu_custom_call.1} parent=39 // pred_check
        %p228 = pneg %p33
      $region42: #{tpu_custom_call.1} parent=39 // pred_check_branch
        %230 = sbr.rel (%p228) target = $region44
      $region43: #{tpu_custom_call.1} parent=39 // pred_region
        %s231 = smul.u32 8, %s13
        %p232 = scmp.lt.s32.totalorder %s231, 31
        %s233 = scalar_select %p232, %s231, 31
        %s234 = smul.addr %s233, 8
        %s235 = scalar_lea.vmem %s0, %s234
        %s236 = smul.u32 8, %s13
      $region44: #{tpu_custom_call.1} parent=39 // pred_fallthru
        _
    $region40: #{tpu_custom_call.1} parent=5 // pred_fallthru
      _
    %p237 = scmp.le.s32.totalorder 1, %s13
    %p238 = scmp.lt.s32.totalorder %s13, 5
    %p239 = pnand %p237, %p238
    %p240 = pneg %p239
    // Predicated region
    $region45: #{tpu_custom_call.1} parent=5 // pred_check
      _
    $region46: #{tpu_custom_call.1} parent=5 // pred_check_branch
      %242 = sbr.rel (%p239) target = $region48
    $region47: #{tpu_custom_call.1} parent=5 // pred_region
      %s243 = ssub.s32 %s13, 1
      %s244 = smul.u32 8, %s18
      %p245 = scmp.lt.s32.totalorder %s244, 31
      %s246 = scalar_select %p245, %s244, 31
      %s247 = smul.addr %s246, 8
      %s248 = scalar_lea.vmem %s0, %s247
      %p249 = pneg %p39
      %p250 = pneg %p36
      %p251 = pneg %p60
      %p252 = pneg %p57
      %p253 = pneg %p81
      %p254 = pneg %p78
      %p255 = pneg %p102
      %p256 = pneg %p99
      %p257 = pneg %p123
      %p258 = pneg %p120
      %p259 = pneg %p144
      %p260 = pneg %p141
      %p261 = pneg %p165
      %p262 = pneg %p162
      %p263 = pneg %p191
      %p264 = pneg %p188
      %s265 = smul.u32 8, %s18
      %p266 = scmp.lt.s32.totalorder %s265, 31
      %s267 = scalar_select %p266, %s265, 31
      %s268 = smul.addr %s267, 8
      %s269 = scalar_lea.vmem %s7, %s268
      %s270 = smul.u32 8, %s18
      %p271 = scmp.lt.s32.totalorder %s270, 31
      %s272 = scalar_select %p271, %s270, 31
      %s273 = smul.addr %s272, 8
      %s274 = scalar_lea.vmem %s0, %s273
      %s275 = smul.u32 8, %s18
      %s276 = smul.u32 8, %s18
      %p277 = scmp.lt.s32.totalorder %s276, 31
      %s278 = scalar_select %p277, %s276, 31
      %s279 = smul.addr %s278, 8
      %s280 = scalar_lea.vmem %s7, %s279
      %s281 = smul.u32 8, %s18
      %v283 = vld [vmem:[%s274] sm:$0xff]
      %v284 = vld [vmem:[%s274 + $0x8] sm:$0xff]
      %v285 = vld [vmem:[%s274 + $0x10] sm:$0xff]
      %v286 = vld [vmem:[%s274 + $0x18] sm:$0xff]
      %v287 = vld [vmem:[%s274 + $0x20] sm:$0xff]
      %v288 = vld [vmem:[%s274 + $0x28] sm:$0xff]
      %v289 = vld [vmem:[%s274 + $0x30] sm:$0xff]
      %v290 = vld [vmem:[%s274 + $0x38] sm:$0xff]
      %v291 = vpack.c.bf16 %v284, %v283
      %v292 = vpack.c.bf16 %v286, %v285
      %v293 = vpack.c.bf16 %v288, %v287
      %v294 = vpack.c.bf16 %v290, %v289
      %v295 = vld [vmem:[%s1] sm:$0xf]
      %v296 = vld [vmem:[%s1 + $0x4] sm:$0xf]
      %v297 = vld [vmem:[%s1 + $0x8] sm:$0xf]
      %v298 = vld [vmem:[%s1 + $0xc] sm:$0xf]
      %v299 = vld [vmem:[%s1 + $0x10] sm:$0xf]
      %v300 = vld [vmem:[%s1 + $0x14] sm:$0xf]
      %v301 = vld [vmem:[%s1 + $0x18] sm:$0xf]
      %v302 = vld [vmem:[%s1 + $0x1c] sm:$0xf]
      %v303 = vld [vmem:[%s2] sm:$0x1]
      %v305 = vlaneseq
      %v306 = vshrl.u32 %v305, 7
      %v307 = vsub.s32 0, %v306
      %v308 = vrot.slane %v303, %v307
      %v318 = vunpack.c.l.b16 %v295
      %v319 = vunpack.c.l.b16 %v296
      %v320 = vunpack.c.l.b16 %v297
      %v321 = vunpack.c.l.b16 %v298
      %v322 = vunpack.c.l.b16 %v299
      %v323 = vunpack.c.l.b16 %v300
      %v324 = vunpack.c.l.b16 %v301
      %v325 = vunpack.c.l.b16 %v302
      %v326 = vpack.c.b16 %v319, %v318
      %v327 = vpack.c.b16 %v321, %v320
      %v328 = vpack.c.b16 %v323, %v322
      %v329 = vpack.c.b16 %v325, %v324
      %vm334 = vcmask 523264
      %v336 = vsel %vm334, %v291, 0
      %v339 = vsel %vm334, %v292, 0
      %v342 = vsel %vm334, %v293, 0
      %v345 = vsel %vm334, %v294, 0
      %347 = vmatprep.subr.bf16.mxu0 0
      %348 = vmatpush1.bf16.msra.mxu0 %v326
      %349 = vmatprep.subr.bf16.mxu0 0
      %350 = vmatpush1.bf16.msra.mxu0 %v327
      %351 = vmatprep.subr.bf16.mxu0 0
      %352 = vmatpush1.bf16.msra.mxu0 %v328
      %353 = vmatprep.subr.bf16.mxu0 0
      %354 = vmatpush1.bf16.msra.mxu0 %v329
      %355 = vmatprep.subr.bf16.mxu0 0
      %356 = vmatpush1.bf16.msra.mxu0 0
      %357 = vmatprep.subr.bf16.mxu0 0
      %358 = vmatpush1.bf16.msra.mxu0 0
      %359 = vmatprep.subr.bf16.mxu0 0
      %360 = vmatpush1.bf16.msra.mxu0 0
      %361 = vmatprep.subr.bf16.mxu0 0
      %362 = vmatpush1.bf16.msra.mxu0 0
      %363 = vmatprep.subr.bf16.mxu0 0
      %364 = vmatpush1.bf16.msra.mxu0 0
      %365 = vmatprep.subr.bf16.mxu0 0
      %366 = vmatpush1.bf16.msra.mxu0 0
      %367 = vmatprep.subr.bf16.mxu0 0
      %368 = vmatpush1.bf16.msra.mxu0 0
      %369 = vmatprep.subr.bf16.mxu0 0
      %370 = vmatpush1.bf16.msra.mxu0 0
      %371 = vmatprep.subr.bf16.mxu0 0
      %372 = vmatpush1.bf16.msra.mxu0 0
      %373 = vmatprep.subr.bf16.mxu0 0
      %374 = vmatpush1.bf16.msra.mxu0 0
      %375 = vmatprep.subr.bf16.mxu0 0
      %376 = vmatpush1.bf16.msra.mxu0 0
      %377 = vmatprep.subr.bf16.mxu0 0
      %378 = vmatpush1.bf16.msra.mxu0 0
      %379 = vmatprep.mubr.bf16.mxu0 0
      %380 = vmatmul.mubr.bf16.gmra.mrb[0].mxu0 %v336
      %v381 = vpop.f32.mrb[0].mxu0
      %v382 = vadd.f32 %v308, %v381
      %v383 = vpop.f32.mrb[0].mxu0
      %v384 = vpop.f32.mrb[0].mxu0
      %v385 = vadd.f32 %v308, %v384
      %v386 = vpop.f32.mrb[0].mxu0
      %387 = vmatprep.mubr.bf16.mxu0 0
      %388 = vmatmul.mubr.bf16.gmra.mrb[0].mxu0 %v339
      %v389 = vpop.f32.mrb[0].mxu0
      %v390 = vadd.f32 %v308, %v389
      %v391 = vpop.f32.mrb[0].mxu0
      %v392 = vpop.f32.mrb[0].mxu0
      %v393 = vadd.f32 %v308, %v392
      %v394 = vpop.f32.mrb[0].mxu0
      %395 = vmatprep.mubr.bf16.mxu0 0
      %396 = vmatmul.mubr.bf16.gmra.mrb[0].mxu0 %v342
      %v397 = vpop.f32.mrb[0].mxu0
      %v398 = vadd.f32 %v308, %v397
      %v399 = vpop.f32.mrb[0].mxu0
      %v400 = vpop.f32.mrb[0].mxu0
      %v401 = vadd.f32 %v308, %v400
      %v402 = vpop.f32.mrb[0].mxu0
      %403 = vmatprep.mubr.bf16.mxu0 0
      %404 = vmatmul.mubr.bf16.gmra.mrb[0].mxu0 %v345
      %v405 = vpop.f32.mrb[0].mxu0
      %v406 = vadd.f32 %v308, %v405
      %v407 = vpop.f32.mrb[0].mxu0
      %v408 = vpop.f32.mrb[0].mxu0
      %v409 = vadd.f32 %v308, %v408
      %v410 = vpop.f32.mrb[0].mxu0
      %411 = vdwg.mxu0
      %v412 = vmax.f32 %v382, 0.0
      %v413 = vmax.f32 %v385, 0.0
      %v414 = vmax.f32 %v390, 0.0
      %v415 = vmax.f32 %v393, 0.0
      %v416 = vmax.f32 %v398, 0.0
      %v417 = vmax.f32 %v401, 0.0
      %v418 = vmax.f32 %v406, 0.0
      %v419 = vmax.f32 %v409, 0.0
      %v420 = vpack.c.bf16 %v413, %v412
      %v421 = vpack.c.bf16 %v415, %v414
      %v422 = vpack.c.bf16 %v417, %v416
      %v423 = vpack.c.bf16 %v419, %v418
      %v424 = vld [vmem:[%s3] sm:$0xf]
      %v425 = vld [vmem:[%s3 + $0x4] sm:$0xf]
      %v426 = vld [vmem:[%s3 + $0x8] sm:$0xf]
      %v427 = vld [vmem:[%s3 + $0xc] sm:$0xf]
      %v428 = vld [vmem:[%s4] sm:$0x1]
      %v430 = vlaneseq
      %v431 = vshrl.u32 %v430, 7
      %v432 = vsub.s32 0, %v431
      %v433 = vrot.slane %v428, %v432
      %v439 = vunpack.c.l.b16 %v424
      %v440 = vunpack.c.l.b16 %v425
      %v441 = vunpack.c.l.b16 %v426
      %v442 = vunpack.c.l.b16 %v427
      %v443 = vpack.c.b16 %v440, %v439
      %v444 = vpack.c.b16 %v442, %v441
      %vm447 = vcmask 261120
      %v449 = vsel %vm447, %v420, 0
      %v452 = vsel %vm447, %v421, 0
      %v455 = vsel %vm447, %v422, 0
      %v458 = vsel %vm447, %v423, 0
      %460 = vmatprep.subr.bf16.mxu0 0
      %461 = vmatpush1.bf16.msra.mxu0 %v443
      %462 = vmatprep.subr.bf16.mxu0 0
      %463 = vmatpush1.bf16.msra.mxu0 %v444
      %464 = vmatprep.subr.bf16.mxu0 0
      %465 = vmatpush1.bf16.msra.mxu0 0
      %466 = vmatprep.subr.bf16.mxu0 0
      %467 = vmatpush1.bf16.msra.mxu0 0
      %468 = vmatprep.subr.bf16.mxu0 0
      %469 = vmatpush1.bf16.msra.mxu0 0
      %470 = vmatprep.subr.bf16.mxu0 0
      %471 = vmatpush1.bf16.msra.mxu0 0
      %472 = vmatprep.subr.bf16.mxu0 0
      %473 = vmatpush1.bf16.msra.mxu0 0
      %474 = vmatprep.subr.bf16.mxu0 0
      %475 = vmatpush1.bf16.msra.mxu0 0
      %476 = vmatprep.subr.bf16.mxu0 0
      %477 = vmatpush1.bf16.msra.mxu0 0
      %478 = vmatprep.subr.bf16.mxu0 0
      %479 = vmatpush1.bf16.msra.mxu0 0
      %480 = vmatprep.subr.bf16.mxu0 0
      %481 = vmatpush1.bf16.msra.mxu0 0
      %482 = vmatprep.subr.bf16.mxu0 0
      %483 = vmatpush1.bf16.msra.mxu0 0
      %484 = vmatprep.subr.bf16.mxu0 0
      %485 = vmatpush1.bf16.msra.mxu0 0
      %486 = vmatprep.subr.bf16.mxu0 0
      %487 = vmatpush1.bf16.msra.mxu0 0
      %488 = vmatprep.subr.bf16.mxu0 0
      %489 = vmatpush1.bf16.msra.mxu0 0
      %490 = vmatprep.subr.bf16.mxu0 0
      %491 = vmatpush1.bf16.msra.mxu0 0
      %492 = vmatprep.mubr.bf16.mxu0 0
      %493 = vmatmul.mubr.bf16.gmra.mrb[0].mxu0 %v449
      %v494 = vpop.f32.mrb[0].mxu0
      %v495 = vadd.f32 %v433, %v494
      %v496 = vpop.f32.mrb[0].mxu0
      %v497 = vpop.f32.mrb[0].mxu0
      %v498 = vadd.f32 %v433, %v497
      %v499 = vpop.f32.mrb[0].mxu0
      %500 = vmatprep.mubr.bf16.mxu0 0
      %501 = vmatmul.mubr.bf16.gmra.mrb[0].mxu0 %v452
      %v502 = vpop.f32.mrb[0].mxu0
      %v503 = vadd.f32 %v433, %v502
      %v504 = vpop.f32.mrb[0].mxu0
      %v505 = vpop.f32.mrb[0].mxu0
      %v506 = vadd.f32 %v433, %v505
      %v507 = vpop.f32.mrb[0].mxu0
      %508 = vmatprep.mubr.bf16.mxu0 0
      %509 = vmatmul.mubr.bf16.gmra.mrb[0].mxu0 %v455
      %v510 = vpop.f32.mrb[0].mxu0
      %v511 = vadd.f32 %v433, %v510
      %v512 = vpop.f32.mrb[0].mxu0
      %v513 = vpop.f32.mrb[0].mxu0
      %v514 = vadd.f32 %v433, %v513
      %v515 = vpop.f32.mrb[0].mxu0
      %516 = vmatprep.mubr.bf16.mxu0 0
      %517 = vmatmul.mubr.bf16.gmra.mrb[0].mxu0 %v458
      %v518 = vpop.f32.mrb[0].mxu0
      %v519 = vadd.f32 %v433, %v518
      %v520 = vpop.f32.mrb[0].mxu0
      %v521 = vpop.f32.mrb[0].mxu0
      %v522 = vadd.f32 %v433, %v521
      %v523 = vpop.f32.mrb[0].mxu0
      %524 = vdwg.mxu0
      %v525 = vmax.f32 %v495, 0.0
      %v526 = vmax.f32 %v498, 0.0
      %v527 = vmax.f32 %v503, 0.0
      %v528 = vmax.f32 %v506, 0.0
      %v529 = vmax.f32 %v511, 0.0
      %v530 = vmax.f32 %v514, 0.0
      %v531 = vmax.f32 %v519, 0.0
      %v532 = vmax.f32 %v522, 0.0
      %v533 = vpack.c.bf16 %v526, %v525
      %v534 = vpack.c.bf16 %v528, %v527
      %v535 = vpack.c.bf16 %v530, %v529
      %v536 = vpack.c.bf16 %v532, %v531
      %v537 = vld [vmem:[%s5] sm:$0xf]
      %v538 = vld [vmem:[%s5 + $0x4] sm:$0xf]
      %v539 = vld [vmem:[%s6] sm:$0x1]
      %v541 = vlaneseq
      %v542 = vshrl.u32 %v541, 7
      %v543 = vsub.s32 0, %v542
      %v544 = vrot.slane %v539, %v543
      %v548 = vunpack.c.l.b16 %v537
      %v549 = vunpack.c.l.b16 %v538
      %v550 = vpack.c.b16 %v549, %v548
      %vm552 = vcmask 130048
      %v554 = vsel %vm552, %v533, 0
      %v557 = vsel %vm552, %v534, 0
      %v560 = vsel %vm552, %v535, 0
      %v563 = vsel %vm552, %v536, 0
      %565 = vmatprep.subr.bf16.mxu0 0
      %566 = vmatpush1.bf16.msra.mxu0 %v550
      %567 = vmatprep.subr.bf16.mxu0 0
      %568 = vmatpush1.bf16.msra.mxu0 0
      %569 = vmatprep.subr.bf16.mxu0 0
      %570 = vmatpush1.bf16.msra.mxu0 0
      %571 = vmatprep.subr.bf16.mxu0 0
      %572 = vmatpush1.bf16.msra.mxu0 0
      %573 = vmatprep.subr.bf16.mxu0 0
      %574 = vmatpush1.bf16.msra.mxu0 0
      %575 = vmatprep.subr.bf16.mxu0 0
      %576 = vmatpush1.bf16.msra.mxu0 0
      %577 = vmatprep.subr.bf16.mxu0 0
      %578 = vmatpush1.bf16.msra.mxu0 0
      %579 = vmatprep.subr.bf16.mxu0 0
      %580 = vmatpush1.bf16.msra.mxu0 0
      %581 = vmatprep.subr.bf16.mxu0 0
      %582 = vmatpush1.bf16.msra.mxu0 0
      %583 = vmatprep.subr.bf16.mxu0 0
      %584 = vmatpush1.bf16.msra.mxu0 0
      %585 = vmatprep.subr.bf16.mxu0 0
      %586 = vmatpush1.bf16.msra.mxu0 0
      %587 = vmatprep.subr.bf16.mxu0 0
      %588 = vmatpush1.bf16.msra.mxu0 0
      %589 = vmatprep.subr.bf16.mxu0 0
      %590 = vmatpush1.bf16.msra.mxu0 0
      %591 = vmatprep.subr.bf16.mxu0 0
      %592 = vmatpush1.bf16.msra.mxu0 0
      %593 = vmatprep.subr.bf16.mxu0 0
      %594 = vmatpush1.bf16.msra.mxu0 0
      %595 = vmatprep.subr.bf16.mxu0 0
      %596 = vmatpush1.bf16.msra.mxu0 0
      %597 = vmatprep.mubr.bf16.mxu0 0
      %598 = vmatmul.mubr.bf16.gmra.mrb[0].mxu0 %v554
      %v599 = vpop.f32.mrb[0].mxu0
      %v600 = vadd.f32 %v544, %v599
      %v601 = vpop.f32.mrb[0].mxu0
      %v602 = vpop.f32.mrb[0].mxu0
      %v603 = vadd.f32 %v544, %v602
      %v604 = vpop.f32.mrb[0].mxu0
      %605 = vmatprep.mubr.bf16.mxu0 0
      %606 = vmatmul.mubr.bf16.gmra.mrb[0].mxu0 %v557
      %v607 = vpop.f32.mrb[0].mxu0
      %v608 = vadd.f32 %v544, %v607
      %v609 = vpop.f32.mrb[0].mxu0
      %v610 = vpop.f32.mrb[0].mxu0
      %v611 = vadd.f32 %v544, %v610
      %v612 = vpop.f32.mrb[0].mxu0
      %613 = vmatprep.mubr.bf16.mxu0 0
      %614 = vmatmul.mubr.bf16.gmra.mrb[0].mxu0 %v560
      %v615 = vpop.f32.mrb[0].mxu0
      %v616 = vadd.f32 %v544, %v615
      %v617 = vpop.f32.mrb[0].mxu0
      %v618 = vpop.f32.mrb[0].mxu0
      %v619 = vadd.f32 %v544, %v618
      %v620 = vpop.f32.mrb[0].mxu0
      %621 = vmatprep.mubr.bf16.mxu0 0
      %622 = vmatmul.mubr.bf16.gmra.mrb[0].mxu0 %v563
      %v623 = vpop.f32.mrb[0].mxu0
      %v624 = vadd.f32 %v544, %v623
      %v625 = vpop.f32.mrb[0].mxu0
      %v626 = vpop.f32.mrb[0].mxu0
      %v627 = vadd.f32 %v544, %v626
      %v628 = vpop.f32.mrb[0].mxu0
      %629 = vdwg.mxu0
      %vm630 = vcmask 80896
      %631 = vst.msk [vmem:[%s280] sm:$0xff] %vm630, %v600
      %632 = vst.msk [vmem:[%s280 + $0x8] sm:$0xff] %vm630, %v603
      %633 = vst.msk [vmem:[%s280 + $0x10] sm:$0xff] %vm630, %v608
      %634 = vst.msk [vmem:[%s280 + $0x18] sm:$0xff] %vm630, %v611
      %635 = vst.msk [vmem:[%s280 + $0x20] sm:$0xff] %vm630, %v616
      %636 = vst.msk [vmem:[%s280 + $0x28] sm:$0xff] %vm630, %v619
      %637 = vst.msk [vmem:[%s280 + $0x30] sm:$0xff] %vm630, %v624
      %638 = vst.msk [vmem:[%s280 + $0x38] sm:$0xff] %vm630, %v627
      %s639 = smul.u32 8, %s18
      %p640 = scmp.lt.s32.totalorder %s639, 31
      %s641 = scalar_select %p640, %s639, 31
      %s642 = smul.addr %s641, 8
      %s643 = scalar_lea.vmem %s7, %s642
      // Predicated region
      $region49: #{tpu_custom_call.1} parent=47 // pred_check
        %p644 = pneg %p188
      $region50: #{tpu_custom_call.1} parent=47 // pred_check_branch
        %646 = sbr.rel (%p644) target = $region52
      $region51: #{tpu_custom_call.1} parent=47 // pred_region
        %s647 = smul.u32 8, %s18
      $region52: #{tpu_custom_call.1} parent=47 // pred_fallthru
        _
    $region48: #{tpu_custom_call.1} parent=5 // pred_fallthru
      _
    %p648 = scmp.le.s32.totalorder 2, %s13
    // Predicated region
    $region53: #{tpu_custom_call.1} parent=5 // pred_check
      %p649 = pneg %p648
    $region54: #{tpu_custom_call.1} parent=5 // pred_check_branch
      %651 = sbr.rel (%p649) target = $region56
    $region55: #{tpu_custom_call.1} parent=5 // pred_region
      %s652 = ssub.s32 %s13, 2
      // Predicated region
      $region57: #{tpu_custom_call.1} parent=55 // pred_check
        %p653 = pneg %p194
      $region58: #{tpu_custom_call.1} parent=55 // pred_check_branch
        %655 = sbr.rel (%p653) target = $region60
      $region59: #{tpu_custom_call.1} parent=55 // pred_region
        %s656 = smul.u32 8, %s19
        %p657 = scmp.lt.s32.totalorder %s656, 31
        %s658 = scalar_select %p657, %s656, 31
        %s659 = smul.addr %s658, 8
        %s660 = scalar_lea.vmem %s7, %s659
      $region60: #{tpu_custom_call.1} parent=55 // pred_fallthru
        _
    $region56: #{tpu_custom_call.1} parent=5 // pred_fallthru
      _
  $region6: #{tpu_custom_call.1} parent=0 // loop_footer
    %s17 = sadd.s32 1, %s13
  $region7: #{tpu_custom_call.1} parent=0 // loop_footer_branch
    %12 = sbr.rel target = $region3
  $region8: #{tpu_custom_call.1} parent=0 // loop_exit
    _

</llo_original>
